<compile_context>
chip_gen: v5e
topology: v5e:2x2
jax: 0.10.0
libtpu: 0.0.40
codegen_flags: <defaults>
</compile_context>

<pallas_src>
import functools
import math

import jax
import jax.numpy as jnp
from jax.experimental import pallas as pl
from jax.experimental.pallas import tpu as pltpu


# ----------------------------------------------------------------------------
# Config (small synthetic MCAN config)
# ----------------------------------------------------------------------------
class Cfg:
    HIDDEN_SIZE = 32
    MULTI_HEAD = 4
    HIDDEN_SIZE_HEAD = 8          # HIDDEN_SIZE // MULTI_HEAD
    FF_SIZE = 64
    DROPOUT_R = 0.1               # eval mode -> identity


NEG_INF = -1000000000.0


# ----------------------------------------------------------------------------
# Fused SA kernel
# ----------------------------------------------------------------------------
def _layer_norm(z, g, b, eps):
    """MCAN custom LayerNorm: unbiased std (d-1), eps added OUTSIDE sqrt."""
    d = z.shape[-1]
    mean = jnp.mean(z, axis=-1, keepdims=True)
    diff = z - mean
    var = jnp.sum(diff * diff, axis=-1, keepdims=True) * (1.0 / (d - 1))
    return g * diff / (jnp.sqrt(var) + eps) + b


def _sa_fused_kernel(x_ref, maskadd_ref, rb_ref, blk_ref,
                     wqkv_ref, bqkv_ref, wm_ref, bm_ref,
                     g1_ref, be1_ref, w1_ref, b1_ref, w2_ref, b2_ref,
                     g2_ref, be2_ref, o_ref, *, nh, dh, eps):
    # x: (R, H) f32 where R = B*S (all batch rows flattened together).
    H = nh * dh
    x = x_ref[...]
    xb = x.astype(jnp.bfloat16)

    # ---- fused (pre-scaled) Q|K|V projection: one bf16 MXU matmul ----------
    qkv = jnp.dot(xb, wqkv_ref[...],
                  preferred_element_type=jnp.float32) + bqkv_ref[...]   # (R, 3H) f32

    q = qkv[:, :H]                 # Wq columns already carry 1/sqrt(dh)
    k = qkv[:, H:2 * H]
    v = qkv[:, 2 * H:]

    # Stack K / V block-diagonally along rows so every head is covered by one
    # matmul:  kstack[h*R + j, c] = k[j, c] if c belongs to head h else 0.
    rb = rb_ref[...]                                             # (nh*R, H) 0/1
    kstack = (jnp.concatenate([k] * nh, axis=0) * rb).astype(jnp.bfloat16)
    vstack = (jnp.concatenate([v] * nh, axis=0) * rb).astype(jnp.bfloat16)

    # scores[i, h*R + j] = q_h[i] . k_h[j]   -- ONE matmul for all heads.
    scores = jax.lax.dot_general(q.astype(jnp.bfloat16), kstack,
                                 (((1,), (1,)), ((), ())),
                                 preferred_element_type=jnp.float32)    # (R, nh*R)

    # Additive mask (cross-batch + padded keys), precomputed wrapper-side.
    scores = scores + maskadd_ref[...]

    # Per-(row, head-block) softmax. The row-wide max is constant within each
    # head block, so it is a valid stabilizing shift for every block.
    scores = scores - jnp.max(scores, axis=-1, keepdims=True)
    e = jnp.exp(scores)                                                 # f32
    # Block-diagonal ones matmul returns each block's sum broadcast across its
    # own 16 columns -> denominators for all heads in one matmul.
    denom = jnp.dot(e.astype(jnp.bfloat16), blk_ref[...],
                    preferred_element_type=jnp.float32)                 # (R, nh*R)
    p = (e / denom).astype(jnp.bfloat16)       # exact division (no approx recip)

    # P @ Vstack directly yields the per-head outputs re-interleaved back into
    # the (R, H) concatenated-head layout (the block-diagonal zeros of vstack
    # route each head's probabilities to its own dh columns).
    atted = jnp.dot(p, vstack, preferred_element_type=jnp.float32)      # (R, H)
    merged = jnp.dot(atted.astype(jnp.bfloat16), wm_ref[...],
                     preferred_element_type=jnp.float32) + bm_ref[...]

    # dropout1 is identity (eval mode)
    h1 = _layer_norm(x + merged, g1_ref[...], be1_ref[...], eps)

    # ---- FFN: Linear -> ReLU -> (dropout=id) -> Linear ---------------------
    f = jnp.maximum(
        jnp.dot(h1.astype(jnp.bfloat16), w1_ref[...],
                preferred_element_type=jnp.float32) + b1_ref[...], 0.0)
    f = jnp.dot(f.astype(jnp.bfloat16), w2_ref[...],
                preferred_element_type=jnp.float32) + b2_ref[...]

    # dropout2 is identity (eval mode)
    o_ref[...] = _layer_norm(h1 + f, g2_ref[...], be2_ref[...], eps)


# ----------------------------------------------------------------------------
# Wrapper
# ----------------------------------------------------------------------------
def sa_forward(params, x, x_mask):
    """SA(x, x_mask). x: (B, S, H) f32. x_mask: (B, S) bool, True = padded key."""
    B, S, H = x.shape
    nh, dh, FF = Cfg.MULTI_HEAD, Cfg.HIDDEN_SIZE_HEAD, Cfg.FF_SIZE
    assert nh * dh == H
    R = B * S
    scale = 1.0 / math.sqrt(dh)

    # Fused Q|K|V weights with the attention scale folded into Wq / bq.
    # Matmul operands in bf16 (native MXU path); biases stay f32.
    wqkv = jnp.concatenate(
        [params['wq'] * scale, params['wk'], params['wv']], axis=1
    ).astype(jnp.bfloat16)                                              # (H, 3H)
    bqkv = jnp.concatenate(
        [params['bq'] * scale, params['bk'], params['bv']], axis=0
    ).reshape(1, 3 * H).astype(jnp.float32)

    # Additive attention mask (R, nh*R): -1e9 for cross-batch or padded keys.
    batch_id = jnp.arange(R) // S
    pad = x_mask.reshape(R)
    bad = (batch_id[:, None] != batch_id[None, :]) | pad[None, :]       # (R, R)
    mask_add = jnp.tile(
        jnp.where(bad, NEG_INF, 0.0).astype(jnp.float32), (1, nh))      # (R, nh*R)

    # Row-block mask for stacking K/V per head: rb[h*R + j, c] = (c // dh == h)
    rb = ((jnp.arange(nh * R)[:, None] // R)
          == (jnp.arange(H)[None, :] // dh)).astype(jnp.float32)        # (nh*R, H)

    # Block-diagonal ones: one matmul -> per-(row, head) softmax denominators
    # broadcast back over each 16-column block.
    blk = ((jnp.arange(nh * R)[:, None] // R)
           == (jnp.arange(nh * R)[None, :] // R)).astype(jnp.bfloat16)  # (nh*R, nh*R)

    x_flat = x.reshape(R, H).astype(jnp.float32)

    vmem = lambda: pl.BlockSpec(memory_space=pltpu.MemorySpace.VMEM)
    out = pl.pallas_call(
        functools.partial(_sa_fused_kernel, nh=nh, dh=dh, eps=1e-6),
        out_shape=jax.ShapeDtypeStruct((R, H), jnp.float32),
        in_specs=[vmem() for _ in range(16)],
        out_specs=vmem(),
    )(x_flat, mask_add, rb, blk,
      wqkv, bqkv,
      params['wm'].astype(jnp.bfloat16), params['bm'].reshape(1, H).astype(jnp.float32),
      params['g1'].reshape(1, H), params['be1'].reshape(1, H),
      params['w1'].astype(jnp.bfloat16), params['b1'].reshape(1, FF).astype(jnp.float32),
      params['w2'].astype(jnp.bfloat16), params['b2'].reshape(1, H).astype(jnp.float32),
      params['g2'].reshape(1, H), params['be2'].reshape(1, H))

    return out.reshape(B, S, H)


# ----------------------------------------------------------------------------
# Pure-JAX reference (mirrors the PyTorch SA module, eval mode)
# ----------------------------------------------------------------------------
def sa_reference(params, x, x_mask):
    B, S, H = x.shape
    nh, dh = Cfg.MULTI_HEAD, Cfg.HIDDEN_SIZE_HEAD

    def lin(z, w, b):
        return z @ w + b

    def ln(z, g, b, eps=1e-6):
        d = z.shape[-1]
        m = z.mean(-1, keepdims=True)
        diff = z - m
        var = (diff * diff).sum(-1, keepdims=True) / (d - 1)
        return g * diff / (jnp.sqrt(var) + eps) + b

    q = lin(x, params['wq'], params['bq']).reshape(B, S, nh, dh).transpose(0, 2, 1, 3)
    k = lin(x, params['wk'], params['bk']).reshape(B, S, nh, dh).transpose(0, 2, 1, 3)
    v = lin(x, params['wv'], params['bv']).reshape(B, S, nh, dh).transpose(0, 2, 1, 3)

    s = jnp.einsum('bhqd,bhkd->bhqk', q, k) / math.sqrt(dh)
    s = jnp.where(x_mask[:, None, None, :], NEG_INF, s)
    p = jax.nn.softmax(s, axis=-1)
    att = jnp.einsum('bhqk,bhkd->bhqd', p, v).transpose(0, 2, 1, 3).reshape(B, S, H)
    att = lin(att, params['wm'], params['bm'])

    h1 = ln(x + att, params['g1'], params['be1'])
    f = jnp.maximum(lin(h1, params['w1'], params['b1']), 0.0)
    f = lin(f, params['w2'], params['b2'])
    return ln(h1 + f, params['g2'], params['be2'])


# ----------------------------------------------------------------------------
# Deterministic parameter init
# ----------------------------------------------------------------------------
class KeyGen:
    def __init__(self, seed):
        self.key = jax.random.PRNGKey(seed)

    def __call__(self):
        self.key, sub = jax.random.split(self.key)
        return sub


def init_params(seed=0):
    kg = KeyGen(seed)
    H, FF = Cfg.HIDDEN_SIZE, Cfg.FF_SIZE

    def lin(i, o, scale=0.05):
        return (jax.random.normal(kg(), (i, o), jnp.float32) * scale,
                jax.random.normal(kg(), (o,), jnp.float32) * scale)

    p = {}
    p['wq'], p['bq'] = lin(H, H)
    p['wk'], p['bk'] = lin(H, H)
    p['wv'], p['bv'] = lin(H, H)
    p['wm'], p['bm'] = lin(H, H)
    p['w1'], p['b1'] = lin(H, FF)
    p['w2'], p['b2'] = lin(FF, H)
    p['g1'], p['be1'] = jnp.ones((H,), jnp.float32), jnp.zeros((H,), jnp.float32)
    p['g2'], p['be2'] = jnp.ones((H,), jnp.float32), jnp.zeros((H,), jnp.float32)
    return p


# ----------------------------------------------------------------------------
# Main
# ----------------------------------------------------------------------------
if __name__ == "__main__":
    B, S = 2, 8
    H = Cfg.HIDDEN_SIZE

    params = init_params(0)

    key = jax.random.PRNGKey(0)
    kx, _ = jax.random.split(key)
    x = jax.random.normal(kx, (B, S, H), jnp.float32)

    # Boolean padding mask (True = masked key position), exercises masked_fill.
    x_mask = jnp.zeros((B, S), jnp.bool_)
    x_mask = x_mask.at[0, 6:].set(True).at[1, 7:].set(True)

    fwd = jax.jit(sa_forward)
    out = fwd(params, x, x_mask)
    out = jax.block_until_ready(out)

    assert out.shape == (B, S, H), out.shape
    assert bool(jnp.all(jnp.isfinite(out)))

    # Correctness check vs. plain-JAX reference of the PyTorch module
    # (tolerance covers the bf16 matmul operands; softmax division is exact).
    ref = sa_reference(params, x, x_mask)
    err = float(jnp.max(jnp.abs(out - ref)))
    assert err < 3e-2, f"max abs err {err}"

    print("KERNEL_OK")
</pallas_src>

<mosaic_0001>
module attributes {stable_mosaic.version = 11 : i64} {
  func.func @_sa_fused_kernel(%arg0: memref<16x32xf32, #tpu.memory_space<vmem>>, %arg1: memref<16x64xf32, #tpu.memory_space<vmem>>, %arg2: memref<64x32xf32, #tpu.memory_space<vmem>>, %arg3: memref<64x64xbf16, #tpu.memory_space<vmem>>, %arg4: memref<32x96xbf16, #tpu.memory_space<vmem>>, %arg5: memref<1x96xf32, #tpu.memory_space<vmem>>, %arg6: memref<32x32xbf16, #tpu.memory_space<vmem>>, %arg7: memref<1x32xf32, #tpu.memory_space<vmem>>, %arg8: memref<1x32xf32, #tpu.memory_space<vmem>>, %arg9: memref<1x32xf32, #tpu.memory_space<vmem>>, %arg10: memref<32x64xbf16, #tpu.memory_space<vmem>>, %arg11: memref<1x64xf32, #tpu.memory_space<vmem>>, %arg12: memref<64x32xbf16, #tpu.memory_space<vmem>>, %arg13: memref<1x32xf32, #tpu.memory_space<vmem>>, %arg14: memref<1x32xf32, #tpu.memory_space<vmem>>, %arg15: memref<1x32xf32, #tpu.memory_space<vmem>>, %arg16: memref<16x32xf32, #tpu.memory_space<vmem>>) attributes {dimension_semantics = [], scalar_prefetch = 0 : i64, scratch_operands = 0 : i64, tpu.core_type = #tpu.core_type<tc>} {
    %c0 = arith.constant 0 : index
    %c0_0 = arith.constant 0 : index
    %0 = vector.load %arg0[%c0, %c0_0] : memref<16x32xf32, #tpu.memory_space<vmem>>, vector<16x32xf32>
    %1 = arith.truncf %0 : vector<16x32xf32> to vector<16x32xbf16>
    %c0_1 = arith.constant 0 : index
    %c0_2 = arith.constant 0 : index
    %2 = vector.load %arg4[%c0_1, %c0_2] : memref<32x96xbf16, #tpu.memory_space<vmem>>, vector<32x96xbf16>
    %cst = arith.constant dense<0.000000e+00> : vector<16x96xf32>
    %3 = tpu.matmul %1, %2, %cst {dimension_numbers = #tpu.dot_dimension_numbers<[1], [0], [0], [1], [0, 0, 1, 1], [], []>} : vector<16x32xbf16>, vector<32x96xbf16>, vector<16x96xf32> -> vector<16x96xf32>
    %c0_3 = arith.constant 0 : index
    %c0_4 = arith.constant 0 : index
    %4 = vector.load %arg5[%c0_3, %c0_4] : memref<1x96xf32, #tpu.memory_space<vmem>>, vector<1x96xf32>
    %5 = vector.broadcast %4 : vector<1x96xf32> to vector<16x96xf32>
    %6 = arith.addf %3, %5 : vector<16x96xf32>
    %7 = vector.extract_strided_slice %6 {offsets = [0, 0], sizes = [16, 32], strides = [1, 1]} : vector<16x96xf32> to vector<16x32xf32>
    %8 = vector.extract_strided_slice %6 {offsets = [0, 32], sizes = [16, 32], strides = [1, 1]} : vector<16x96xf32> to vector<16x32xf32>
    %9 = vector.extract_strided_slice %6 {offsets = [0, 64], sizes = [16, 32], strides = [1, 1]} : vector<16x96xf32> to vector<16x32xf32>
    %c0_5 = arith.constant 0 : index
    %c0_6 = arith.constant 0 : index
    %10 = vector.load %arg2[%c0_5, %c0_6] : memref<64x32xf32, #tpu.memory_space<vmem>>, vector<64x32xf32>
    %11 = tpu.concatenate %8, %8, %8, %8 in 0 : vector<16x32xf32>, vector<16x32xf32>, vector<16x32xf32>, vector<16x32xf32> -> vector<64x32xf32>
    %12 = arith.mulf %11, %10 : vector<64x32xf32>
    %13 = arith.truncf %12 : vector<64x32xf32> to vector<64x32xbf16>
    %14 = tpu.concatenate %9, %9, %9, %9 in 0 : vector<16x32xf32>, vector<16x32xf32>, vector<16x32xf32>, vector<16x32xf32> -> vector<64x32xf32>
    %15 = arith.mulf %14, %10 : vector<64x32xf32>
    %16 = arith.truncf %15 : vector<64x32xf32> to vector<64x32xbf16>
    %17 = arith.truncf %7 : vector<16x32xf32> to vector<16x32xbf16>
    %cst_7 = arith.constant dense<0.000000e+00> : vector<16x64xf32>
    %18 = tpu.matmul %17, %13, %cst_7 {dimension_numbers = #tpu.dot_dimension_numbers<[1], [1], [0], [0], [0, 0, 1, 0], [], []>} : vector<16x32xbf16>, vector<64x32xbf16>, vector<16x64xf32> -> vector<16x64xf32>
    %c0_8 = arith.constant 0 : index
    %c0_9 = arith.constant 0 : index
    %19 = vector.load %arg1[%c0_8, %c0_9] : memref<16x64xf32, #tpu.memory_space<vmem>>, vector<16x64xf32>
    %20 = arith.addf %18, %19 : vector<16x64xf32>
    %cst_10 = arith.constant dense<0xFF800000> : vector<16xf32>
    %21 = vector.multi_reduction <maximumf>, %20, %cst_10 [1] : vector<16x64xf32> to vector<16xf32>
    %22 = vector.shape_cast %21 : vector<16xf32> to vector<16x1xf32>
    %23 = vector.broadcast %22 : vector<16x1xf32> to vector<16x64xf32>
    %24 = arith.subf %20, %23 : vector<16x64xf32>
    %25 = math.exp %24 : vector<16x64xf32>
    %26 = arith.truncf %25 : vector<16x64xf32> to vector<16x64xbf16>
    %c0_11 = arith.constant 0 : index
    %c0_12 = arith.constant 0 : index
    %27 = vector.load %arg3[%c0_11, %c0_12] : memref<64x64xbf16, #tpu.memory_space<vmem>>, vector<64x64xbf16>
    %cst_13 = arith.constant dense<0.000000e+00> : vector<16x64xf32>
    %28 = tpu.matmul %26, %27, %cst_13 {dimension_numbers = #tpu.dot_dimension_numbers<[1], [0], [0], [1], [0, 0, 1, 1], [], []>} : vector<16x64xbf16>, vector<64x64xbf16>, vector<16x64xf32> -> vector<16x64xf32>
    %29 = arith.divf %25, %28 : vector<16x64xf32>
    %30 = arith.truncf %29 : vector<16x64xf32> to vector<16x64xbf16>
    %cst_14 = arith.constant dense<0.000000e+00> : vector<16x32xf32>
    %31 = tpu.matmul %30, %16, %cst_14 {dimension_numbers = #tpu.dot_dimension_numbers<[1], [0], [0], [1], [0, 0, 1, 1], [], []>} : vector<16x64xbf16>, vector<64x32xbf16>, vector<16x32xf32> -> vector<16x32xf32>
    %32 = arith.truncf %31 : vector<16x32xf32> to vector<16x32xbf16>
    %c0_15 = arith.constant 0 : index
    %c0_16 = arith.constant 0 : index
    %33 = vector.load %arg6[%c0_15, %c0_16] : memref<32x32xbf16, #tpu.memory_space<vmem>>, vector<32x32xbf16>
    %cst_17 = arith.constant dense<0.000000e+00> : vector<16x32xf32>
    %34 = tpu.matmul %32, %33, %cst_17 {dimension_numbers = #tpu.dot_dimension_numbers<[1], [0], [0], [1], [0, 0, 1, 1], [], []>} : vector<16x32xbf16>, vector<32x32xbf16>, vector<16x32xf32> -> vector<16x32xf32>
    %c0_18 = arith.constant 0 : index
    %c0_19 = arith.constant 0 : index
    %35 = vector.load %arg7[%c0_18, %c0_19] : memref<1x32xf32, #tpu.memory_space<vmem>>, vector<1x32xf32>
    %36 = vector.broadcast %35 : vector<1x32xf32> to vector<16x32xf32>
    %37 = arith.addf %34, %36 : vector<16x32xf32>
    %38 = arith.addf %0, %37 : vector<16x32xf32>
    %c0_20 = arith.constant 0 : index
    %c0_21 = arith.constant 0 : index
    %39 = vector.load %arg8[%c0_20, %c0_21] : memref<1x32xf32, #tpu.memory_space<vmem>>, vector<1x32xf32>
    %c0_22 = arith.constant 0 : index
    %c0_23 = arith.constant 0 : index
    %40 = vector.load %arg9[%c0_22, %c0_23] : memref<1x32xf32, #tpu.memory_space<vmem>>, vector<1x32xf32>
    %cst_24 = arith.constant dense<0.000000e+00> : vector<16xf32>
    %41 = vector.multi_reduction <add>, %38, %cst_24 [1] : vector<16x32xf32> to vector<16xf32>
    %42 = vector.shape_cast %41 : vector<16xf32> to vector<16x1xf32>
    %cst_25 = arith.constant 3.200000e+01 : f32
    %43 = vector.broadcast %cst_25 : f32 to vector<16x1xf32>
    %44 = arith.divf %42, %43 : vector<16x1xf32>
    %45 = vector.broadcast %44 : vector<16x1xf32> to vector<16x32xf32>
    %46 = arith.subf %38, %45 : vector<16x32xf32>
    %47 = arith.mulf %46, %46 : vector<16x32xf32>
    %cst_26 = arith.constant dense<0.000000e+00> : vector<16xf32>
    %48 = vector.multi_reduction <add>, %47, %cst_26 [1] : vector<16x32xf32> to vector<16xf32>
    %49 = vector.shape_cast %48 : vector<16xf32> to vector<16x1xf32>
    %cst_27 = arith.constant 0.0322580636 : f32
    %50 = vector.broadcast %cst_27 : f32 to vector<16x1xf32>
    %51 = arith.mulf %49, %50 : vector<16x1xf32>
    %52 = vector.broadcast %39 : vector<1x32xf32> to vector<16x32xf32>
    %53 = arith.mulf %52, %46 : vector<16x32xf32>
    %54 = math.sqrt %51 : vector<16x1xf32>
    %cst_28 = arith.constant 9.99999997E-7 : f32
    %55 = vector.broadcast %cst_28 : f32 to vector<16x1xf32>
    %56 = arith.addf %54, %55 : vector<16x1xf32>
    %57 = vector.broadcast %56 : vector<16x1xf32> to vector<16x32xf32>
    %58 = arith.divf %53, %57 : vector<16x32xf32>
    %59 = vector.broadcast %40 : vector<1x32xf32> to vector<16x32xf32>
    %60 = arith.addf %58, %59 : vector<16x32xf32>
    %61 = arith.truncf %60 : vector<16x32xf32> to vector<16x32xbf16>
    %c0_29 = arith.constant 0 : index
    %c0_30 = arith.constant 0 : index
    %62 = vector.load %arg10[%c0_29, %c0_30] : memref<32x64xbf16, #tpu.memory_space<vmem>>, vector<32x64xbf16>
    %cst_31 = arith.constant dense<0.000000e+00> : vector<16x64xf32>
    %63 = tpu.matmul %61, %62, %cst_31 {dimension_numbers = #tpu.dot_dimension_numbers<[1], [0], [0], [1], [0, 0, 1, 1], [], []>} : vector<16x32xbf16>, vector<32x64xbf16>, vector<16x64xf32> -> vector<16x64xf32>
    %c0_32 = arith.constant 0 : index
    %c0_33 = arith.constant 0 : index
    %64 = vector.load %arg11[%c0_32, %c0_33] : memref<1x64xf32, #tpu.memory_space<vmem>>, vector<1x64xf32>
    %65 = vector.broadcast %64 : vector<1x64xf32> to vector<16x64xf32>
    %66 = arith.addf %63, %65 : vector<16x64xf32>
    %cst_34 = arith.constant 0.000000e+00 : f32
    %67 = vector.broadcast %cst_34 : f32 to vector<16x64xf32>
    %68 = arith.maximumf %66, %67 : vector<16x64xf32>
    %69 = arith.truncf %68 : vector<16x64xf32> to vector<16x64xbf16>
    %c0_35 = arith.constant 0 : index
    %c0_36 = arith.constant 0 : index
    %70 = vector.load %arg12[%c0_35, %c0_36] : memref<64x32xbf16, #tpu.memory_space<vmem>>, vector<64x32xbf16>
    %cst_37 = arith.constant dense<0.000000e+00> : vector<16x32xf32>
    %71 = tpu.matmul %69, %70, %cst_37 {dimension_numbers = #tpu.dot_dimension_numbers<[1], [0], [0], [1], [0, 0, 1, 1], [], []>} : vector<16x64xbf16>, vector<64x32xbf16>, vector<16x32xf32> -> vector<16x32xf32>
    %c0_38 = arith.constant 0 : index
    %c0_39 = arith.constant 0 : index
    %72 = vector.load %arg13[%c0_38, %c0_39] : memref<1x32xf32, #tpu.memory_space<vmem>>, vector<1x32xf32>
    %73 = vector.broadcast %72 : vector<1x32xf32> to vector<16x32xf32>
    %74 = arith.addf %71, %73 : vector<16x32xf32>
    %75 = arith.addf %60, %74 : vector<16x32xf32>
    %c0_40 = arith.constant 0 : index
    %c0_41 = arith.constant 0 : index
    %76 = vector.load %arg14[%c0_40, %c0_41] : memref<1x32xf32, #tpu.memory_space<vmem>>, vector<1x32xf32>
    %c0_42 = arith.constant 0 : index
    %c0_43 = arith.constant 0 : index
    %77 = vector.load %arg15[%c0_42, %c0_43] : memref<1x32xf32, #tpu.memory_space<vmem>>, vector<1x32xf32>
    %cst_44 = arith.constant dense<0.000000e+00> : vector<16xf32>
    %78 = vector.multi_reduction <add>, %75, %cst_44 [1] : vector<16x32xf32> to vector<16xf32>
    %79 = vector.shape_cast %78 : vector<16xf32> to vector<16x1xf32>
    %cst_45 = arith.constant 3.200000e+01 : f32
    %80 = vector.broadcast %cst_45 : f32 to vector<16x1xf32>
    %81 = arith.divf %79, %80 : vector<16x1xf32>
    %82 = vector.broadcast %81 : vector<16x1xf32> to vector<16x32xf32>
    %83 = arith.subf %75, %82 : vector<16x32xf32>
    %84 = arith.mulf %83, %83 : vector<16x32xf32>
    %cst_46 = arith.constant dense<0.000000e+00> : vector<16xf32>
    %85 = vector.multi_reduction <add>, %84, %cst_46 [1] : vector<16x32xf32> to vector<16xf32>
    %86 = vector.shape_cast %85 : vector<16xf32> to vector<16x1xf32>
    %cst_47 = arith.constant 0.0322580636 : f32
    %87 = vector.broadcast %cst_47 : f32 to vector<16x1xf32>
    %88 = arith.mulf %86, %87 : vector<16x1xf32>
    %89 = vector.broadcast %76 : vector<1x32xf32> to vector<16x32xf32>
    %90 = arith.mulf %89, %83 : vector<16x32xf32>
    %91 = math.sqrt %88 : vector<16x1xf32>
    %cst_48 = arith.constant 9.99999997E-7 : f32
    %92 = vector.broadcast %cst_48 : f32 to vector<16x1xf32>
    %93 = arith.addf %91, %92 : vector<16x1xf32>
    %94 = vector.broadcast %93 : vector<16x1xf32> to vector<16x32xf32>
    %95 = arith.divf %90, %94 : vector<16x32xf32>
    %96 = vector.broadcast %77 : vector<1x32xf32> to vector<16x32xf32>
    %97 = arith.addf %95, %96 : vector<16x32xf32>
    %c0_49 = arith.constant 0 : index
    %c0_50 = arith.constant 0 : index
    %98 = vector.load %arg16[%c0_49, %c0_50] : memref<16x32xf32, #tpu.memory_space<vmem>>, vector<16x32xf32>
    tpu.vector_store %arg16[%c0_49, %c0_50], %97 {strides = array<i32>} : memref<16x32xf32, #tpu.memory_space<vmem>>, vector<16x32xf32>,
    return
  }
}

</mosaic_0001>

<llo_original>
// kernel: tile.9
$region0: #{tile.9}
  %s0 = inlined_call_operand.vmem [shape: f32[16,4,16], index: 0, kind: input, shape index: {}]
  %s1 = inlined_call_operand.vmem [shape: f32[16,64], index: 1, kind: output, shape index: {}]
  $region1: #{tile.9} parent=0
    #allocation0 [shape = 'u8[65536]{0}', space=vmem, size = 0x10000, scoped, tag = 'scoped mem for input reshape']
    %s3 = ssub.s32 16, 1
    %s4 = scalar_lea.vmem %s0, 60
    %v5 = vld [vmem:[%s4] sm:%s3]
    %s6 = scalar_lea.vmem [#allocation0], 120
    %7 = vst [vmem:[%s6] sm:%s3] %v5
    %s8 = scalar_lea.vmem %s0, 56
    %v9 = vld [vmem:[%s8] sm:%s3]
    %s10 = scalar_lea.vmem [#allocation0], 112
    %11 = vst [vmem:[%s10] sm:%s3] %v9
    %s12 = scalar_lea.vmem %s0, 52
    %v13 = vld [vmem:[%s12] sm:%s3]
    %s14 = scalar_lea.vmem [#allocation0], 104
    %15 = vst [vmem:[%s14] sm:%s3] %v13
    %s16 = scalar_lea.vmem %s0, 48
    %v17 = vld [vmem:[%s16] sm:%s3]
    %s18 = scalar_lea.vmem [#allocation0], 96
    %19 = vst [vmem:[%s18] sm:%s3] %v17
    %s20 = scalar_lea.vmem %s0, 44
    %v21 = vld [vmem:[%s20] sm:%s3]
    %s22 = scalar_lea.vmem [#allocation0], 88
    %23 = vst [vmem:[%s22] sm:%s3] %v21
    %s24 = scalar_lea.vmem %s0, 40
    %v25 = vld [vmem:[%s24] sm:%s3]
    %s26 = scalar_lea.vmem [#allocation0], 80
    %27 = vst [vmem:[%s26] sm:%s3] %v25
    %s28 = scalar_lea.vmem %s0, 36
    %v29 = vld [vmem:[%s28] sm:%s3]
    %s30 = scalar_lea.vmem [#allocation0], 72
    %31 = vst [vmem:[%s30] sm:%s3] %v29
    %s32 = scalar_lea.vmem %s0, 32
    %v33 = vld [vmem:[%s32] sm:%s3]
    %s34 = scalar_lea.vmem [#allocation0], 64
    %35 = vst [vmem:[%s34] sm:%s3] %v33
    %s36 = scalar_lea.vmem %s0, 28
    %v37 = vld [vmem:[%s36] sm:%s3]
    %s38 = scalar_lea.vmem [#allocation0], 56
    %39 = vst [vmem:[%s38] sm:%s3] %v37
    %s40 = scalar_lea.vmem %s0, 24
    %v41 = vld [vmem:[%s40] sm:%s3]
    %s42 = scalar_lea.vmem [#allocation0], 48
    %43 = vst [vmem:[%s42] sm:%s3] %v41
    %s44 = scalar_lea.vmem %s0, 20
    %v45 = vld [vmem:[%s44] sm:%s3]
    %s46 = scalar_lea.vmem [#allocation0], 40
    %47 = vst [vmem:[%s46] sm:%s3] %v45
    %s48 = scalar_lea.vmem %s0, 16
    %v49 = vld [vmem:[%s48] sm:%s3]
    %s50 = scalar_lea.vmem [#allocation0], 32
    %51 = vst [vmem:[%s50] sm:%s3] %v49
    %s52 = scalar_lea.vmem %s0, 12
    %v53 = vld [vmem:[%s52] sm:%s3]
    %s54 = scalar_lea.vmem [#allocation0], 24
    %55 = vst [vmem:[%s54] sm:%s3] %v53
    %s56 = scalar_lea.vmem %s0, 8
    %v57 = vld [vmem:[%s56] sm:%s3]
    %s58 = scalar_lea.vmem [#allocation0], 16
    %59 = vst [vmem:[%s58] sm:%s3] %v57
    %s60 = scalar_lea.vmem %s0, 4
    %v61 = vld [vmem:[%s60] sm:%s3]
    %s62 = scalar_lea.vmem [#allocation0], 8
    %63 = vst [vmem:[%s62] sm:%s3] %v61
    %v64 = vld [vmem:[%s0] sm:%s3]
    %65 = vst [vmem:[#allocation0] sm:%s3] %v64
    %v66 = vld [vmem:[#allocation0] ss:$8 sm:$0xf]
    %v67 = vld [vmem:[#allocation0] ss:$8 sm:$0xf0]
    %vm68 = vcmask 1047556
    %v69 = vsel %vm68, %v67, %v66
    %vm70 = vcmask 130048
    %71 = vst.msk [vmem:[%s1] sm:$0xff] %vm70, %v69
    %s72 = scalar_lea.vmem [#allocation0], 64
    %v73 = vld [vmem:[%s72] ss:$8 sm:$0xf]
    %s74 = scalar_lea.vmem [#allocation0], 64
    %v75 = vld [vmem:[%s74] ss:$8 sm:$0xf0]
    %vm76 = vcmask 1047556
    %v77 = vsel %vm76, %v75, %v73
    %vm78 = vcmask 130048
    %s79 = scalar_lea.vmem %s1, 8
    %80 = vst.msk [vmem:[%s79] sm:$0xff] %vm78, %v77
    %s81 = scalar_lea.vmem [#allocation0], 3
    %v82 = vld [vmem:[%s81] ss:$8 sm:$0xf]
    %s83 = scalar_lea.vmem [#allocation0], 3
    %v84 = vld [vmem:[%s83] ss:$8 sm:$0xf0]
    %vm85 = vcmask 1047556
    %v86 = vsel %vm85, %v84, %v82
    %87 = vrot.lane.b32.xlu0 %v86, 48
    %v88 = vpop.permute.xlu0 %87
    %vm89 = vcmask 523648
    %90 = vst.msk [vmem:[%s1] sm:$0xff] %vm89, %v88
    %s91 = scalar_lea.vmem [#allocation0], 67
    %v92 = vld [vmem:[%s91] ss:$8 sm:$0xf]
    %s93 = scalar_lea.vmem [#allocation0], 67
    %v94 = vld [vmem:[%s93] ss:$8 sm:$0xf0]
    %vm95 = vcmask 1047556
    %v96 = vsel %vm95, %v94, %v92
    %97 = vrot.lane.b32.xlu0 %v96, 48
    %v98 = vpop.permute.xlu0 %97
    %vm99 = vcmask 523648
    %s100 = scalar_lea.vmem %s1, 8
    %101 = vst.msk [vmem:[%s100] sm:$0xff] %vm99, %v98
    %s102 = scalar_lea.vmem [#allocation0], 2
    %v103 = vld [vmem:[%s102] ss:$8 sm:$0xf]
    %s104 = scalar_lea.vmem [#allocation0], 2
    %v105 = vld [vmem:[%s104] ss:$8 sm:$0xf0]
    %vm106 = vcmask 1047556
    %v107 = vsel %vm106, %v105, %v103
    %108 = vrot.lane.b32.xlu0 %v107, 32
    %v109 = vpop.permute.xlu0 %108
    %vm110 = vcmask 392448
    %111 = vst.msk [vmem:[%s1] sm:$0xff] %vm110, %v109
    %s112 = scalar_lea.vmem [#allocation0], 66
    %v113 = vld [vmem:[%s112] ss:$8 sm:$0xf]
    %s114 = scalar_lea.vmem [#allocation0], 66
    %v115 = vld [vmem:[%s114] ss:$8 sm:$0xf0]
    %vm116 = vcmask 1047556
    %v117 = vsel %vm116, %v115, %v113
    %118 = vrot.lane.b32.xlu0 %v117, 32
    %v119 = vpop.permute.xlu0 %118
    %vm120 = vcmask 392448
    %s121 = scalar_lea.vmem %s1, 8
    %122 = vst.msk [vmem:[%s121] sm:$0xff] %vm120, %v119
    %s123 = scalar_lea.vmem [#allocation0], 1
    %v124 = vld [vmem:[%s123] ss:$8 sm:$0xf]
    %s125 = scalar_lea.vmem [#allocation0], 1
    %v126 = vld [vmem:[%s125] ss:$8 sm:$0xf0]
    %vm127 = vcmask 1047556
    %v128 = vsel %vm127, %v126, %v124
    %129 = vrot.lane.b32.xlu0 %v128, 16
    %v130 = vpop.permute.xlu0 %129
    %vm131 = vcmask 261248
    %132 = vst.msk [vmem:[%s1] sm:$0xff] %vm131, %v130
    %s133 = scalar_lea.vmem [#allocation0], 65
    %v134 = vld [vmem:[%s133] ss:$8 sm:$0xf]
    %s135 = scalar_lea.vmem [#allocation0], 65
    %v136 = vld [vmem:[%s135] ss:$8 sm:$0xf0]
    %vm137 = vcmask 1047556
    %v138 = vsel %vm137, %v136, %v134
    %139 = vrot.lane.b32.xlu0 %v138, 16
    %v140 = vpop.permute.xlu0 %139
    %vm141 = vcmask 261248
    %s142 = scalar_lea.vmem %s1, 8
    %143 = vst.msk [vmem:[%s142] sm:$0xff] %vm141, %v140

// kernel: sa_forward.1
$region0: #{sa_forward.1}
  #allocation0 [shape = 'u32[]', space=smem, size = 0x4, offset = 0x4, fixed_abs, tag = 'smem constant byte address 0x4 - core index']
  #allocation1 [shape = 'u32[72,128]{1,0:T(1,128)}', space=vmem, size = 0x9000, scoped, tag = 'internal scratch']
  %s0 = inlined_call_operand.vmem [shape: f32[16,32], index: 0, kind: input, shape index: {}]
  %s1 = inlined_call_operand.vmem [shape: f32[16,64], index: 1, kind: input, shape index: {}]
  %s2 = inlined_call_operand.vmem [shape: f32[64,32], index: 2, kind: input, shape index: {}]
  %s3 = inlined_call_operand.vmem [shape: bf16[64,64], index: 3, kind: input, shape index: {}]
  %s4 = inlined_call_operand.vmem [shape: bf16[32,96], index: 4, kind: input, shape index: {}]
  %s5 = inlined_call_operand.vmem [shape: f32[1,96], index: 5, kind: input, shape index: {}]
  %s6 = inlined_call_operand.vmem [shape: bf16[32,32], index: 6, kind: input, shape index: {}]
  %s7 = inlined_call_operand.vmem [shape: f32[1,32], index: 7, kind: input, shape index: {}]
  %s8 = inlined_call_operand.vmem [shape: f32[1,32], index: 8, kind: input, shape index: {}]
  %s9 = inlined_call_operand.vmem [shape: f32[1,32], index: 9, kind: input, shape index: {}]
  %s10 = inlined_call_operand.vmem [shape: bf16[32,64], index: 10, kind: input, shape index: {}]
  %s11 = inlined_call_operand.vmem [shape: f32[1,64], index: 11, kind: input, shape index: {}]
  %s12 = inlined_call_operand.vmem [shape: bf16[64,32], index: 12, kind: input, shape index: {}]
  %s13 = inlined_call_operand.vmem [shape: f32[1,32], index: 13, kind: input, shape index: {}]
  %s14 = inlined_call_operand.vmem [shape: f32[1,32], index: 14, kind: input, shape index: {}]
  %s15 = inlined_call_operand.vmem [shape: f32[1,32], index: 15, kind: input, shape index: {}]
  %s16 = inlined_call_operand.hbm [shape: f32[16,32], index: 16, kind: output, shape index: {}]
  %s17 = sld [smem:[#allocation0]]
  $region74: #{sa_forward.1} parent=0
    _
  %s19 = ssub.s32 1, %s17
  %s20 = scalar_select 0, %s19, %s17
  $region1: #{sa_forward.1} parent=0
    #allocation2 [shape = 'u8[8192]{0}', space=vmem, size = 0x2000, scoped, tag = 'output window, operand 0, single buffered']
    #allocation3 [shape = 's32[1]{0}', space=sflag, size = 0x4, scoped, tag = 'scoped memory for sa_forward.1']
    %21 = vsyncpa [#allocation3], 0
    // Predicated region
    $region2: #{sa_forward.1} parent=1 // pred_check
      _
    $region3: #{sa_forward.1} parent=1 // pred_check_branch
      %23 = sbr.rel (0) target = $region5
    $region4: #{sa_forward.1} parent=1 // pred_region
      _
    $region5: #{sa_forward.1} parent=1 // pred_fallthru
      _
    // Predicated region
    $region6: #{sa_forward.1} parent=1 // pred_check
      _
    $region7: #{sa_forward.1} parent=1 // pred_check_branch
      %25 = sbr.rel (0) target = $region9
    $region8: #{sa_forward.1} parent=1 // pred_region
      _
    $region9: #{sa_forward.1} parent=1 // pred_fallthru
      _
    // Predicated region
    $region10: #{sa_forward.1} parent=1 // pred_check
      _
    $region11: #{sa_forward.1} parent=1 // pred_check_branch
      %27 = sbr.rel (0) target = $region13
    $region12: #{sa_forward.1} parent=1 // pred_region
      _
    $region13: #{sa_forward.1} parent=1 // pred_fallthru
      _
    // Predicated region
    $region14: #{sa_forward.1} parent=1 // pred_check
      _
    $region15: #{sa_forward.1} parent=1 // pred_check_branch
      %29 = sbr.rel (0) target = $region17
    $region16: #{sa_forward.1} parent=1 // pred_region
      _
    $region17: #{sa_forward.1} parent=1 // pred_fallthru
      _
    // Predicated region
    $region18: #{sa_forward.1} parent=1 // pred_check
      _
    $region19: #{sa_forward.1} parent=1 // pred_check_branch
      %31 = sbr.rel (0) target = $region21
    $region20: #{sa_forward.1} parent=1 // pred_region
      _
    $region21: #{sa_forward.1} parent=1 // pred_fallthru
      _
    // Predicated region
    $region22: #{sa_forward.1} parent=1 // pred_check
      _
    $region23: #{sa_forward.1} parent=1 // pred_check_branch
      %33 = sbr.rel (0) target = $region25
    $region24: #{sa_forward.1} parent=1 // pred_region
      _
    $region25: #{sa_forward.1} parent=1 // pred_fallthru
      _
    // Predicated region
    $region26: #{sa_forward.1} parent=1 // pred_check
      _
    $region27: #{sa_forward.1} parent=1 // pred_check_branch
      %35 = sbr.rel (0) target = $region29
    $region28: #{sa_forward.1} parent=1 // pred_region
      _
    $region29: #{sa_forward.1} parent=1 // pred_fallthru
      _
    // Predicated region
    $region30: #{sa_forward.1} parent=1 // pred_check
      _
    $region31: #{sa_forward.1} parent=1 // pred_check_branch
      %37 = sbr.rel (0) target = $region33
    $region32: #{sa_forward.1} parent=1 // pred_region
      _
    $region33: #{sa_forward.1} parent=1 // pred_fallthru
      _
    // Predicated region
    $region34: #{sa_forward.1} parent=1 // pred_check
      _
    $region35: #{sa_forward.1} parent=1 // pred_check_branch
      %39 = sbr.rel (0) target = $region37
    $region36: #{sa_forward.1} parent=1 // pred_region
      _
    $region37: #{sa_forward.1} parent=1 // pred_fallthru
      _
    // Predicated region
    $region38: #{sa_forward.1} parent=1 // pred_check
      _
    $region39: #{sa_forward.1} parent=1 // pred_check_branch
      %41 = sbr.rel (0) target = $region41
    $region40: #{sa_forward.1} parent=1 // pred_region
      _
    $region41: #{sa_forward.1} parent=1 // pred_fallthru
      _
    // Predicated region
    $region42: #{sa_forward.1} parent=1 // pred_check
      _
    $region43: #{sa_forward.1} parent=1 // pred_check_branch
      %43 = sbr.rel (0) target = $region45
    $region44: #{sa_forward.1} parent=1 // pred_region
      _
    $region45: #{sa_forward.1} parent=1 // pred_fallthru
      _
    // Predicated region
    $region46: #{sa_forward.1} parent=1 // pred_check
      _
    $region47: #{sa_forward.1} parent=1 // pred_check_branch
      %45 = sbr.rel (0) target = $region49
    $region48: #{sa_forward.1} parent=1 // pred_region
      _
    $region49: #{sa_forward.1} parent=1 // pred_fallthru
      _
    // Predicated region
    $region50: #{sa_forward.1} parent=1 // pred_check
      _
    $region51: #{sa_forward.1} parent=1 // pred_check_branch
      %47 = sbr.rel (0) target = $region53
    $region52: #{sa_forward.1} parent=1 // pred_region
      _
    $region53: #{sa_forward.1} parent=1 // pred_fallthru
      _
    // Predicated region
    $region54: #{sa_forward.1} parent=1 // pred_check
      _
    $region55: #{sa_forward.1} parent=1 // pred_check_branch
      %49 = sbr.rel (0) target = $region57
    $region56: #{sa_forward.1} parent=1 // pred_region
      _
    $region57: #{sa_forward.1} parent=1 // pred_fallthru
      _
    // Predicated region
    $region58: #{sa_forward.1} parent=1 // pred_check
      _
    $region59: #{sa_forward.1} parent=1 // pred_check_branch
      %51 = sbr.rel (0) target = $region61
    $region60: #{sa_forward.1} parent=1 // pred_region
      _
    $region61: #{sa_forward.1} parent=1 // pred_fallthru
      _
    // Predicated region
    $region62: #{sa_forward.1} parent=1 // pred_check
      _
    $region63: #{sa_forward.1} parent=1 // pred_check_branch
      %53 = sbr.rel (0) target = $region65
    $region64: #{sa_forward.1} parent=1 // pred_region
      _
    $region65: #{sa_forward.1} parent=1 // pred_fallthru
      _
    %v55 = vld [vmem:[%s0] sm:$0xff]
    %v56 = vld [vmem:[%s0 + $0x8] sm:$0xff]
    %v57 = vpack.c.bf16 %v56, %v55
    %v58 = vld [vmem:[%s4] sm:$0xf]
    %v59 = vld [vmem:[%s4 + $0x4] sm:$0xf]
    %v60 = vld [vmem:[%s4 + $0x8] sm:$0xf]
    %v61 = vld [vmem:[%s4 + $0xc] sm:$0xf]
    %v62 = vld [vmem:[%s5] sm:$0x1]
    %v64 = vperm.slane %v62, 0
    %v70 = vunpack.c.l.b16 %v58
    %v71 = vunpack.c.l.b16 %v59
    %v72 = vunpack.c.l.b16 %v60
    %v73 = vunpack.c.l.b16 %v61
    %v74 = vpack.c.b16 %v71, %v70
    %v75 = vpack.c.b16 %v73, %v72
    %vm78 = vcmask 261120
    %v80 = vsel %vm78, %v57, 0
    %82 = vmatpush.bf16.msra.mxu0 0
    %83 = vmatpush.bf16.msra.mxu0 0
    %84 = vmatpush.bf16.msra.mxu0 0
    %85 = vmatpush.bf16.msra.mxu0 0
    %86 = vmatpush.bf16.msra.mxu0 0
    %87 = vmatpush.bf16.msra.mxu0 0
    %88 = vmatpush.bf16.msra.mxu0 %v75
    %89 = vmatpush.bf16.msra.mxu0 %v74
    %90 = vmatmul.bf16.gmra.mxu0 %v80
    %v91 = vpop.f32.mrf.mxu0
    %v92 = vadd.f32 %v64, %v91
    %v93 = vpop.f32.mrf.mxu0
    %v94 = vadd.f32 %v64, %v93
    %95 = vdwg.mxu0
    %v96 = vld [vmem:[%s2] sm:$0xff]
    %v97 = vld [vmem:[%s2 + $0x8] sm:$0xff]
    %v98 = vld [vmem:[%s2 + $0x10] sm:$0xff]
    %v99 = vld [vmem:[%s2 + $0x18] sm:$0xff]
    %v100 = vld [vmem:[%s2 + $0x20] sm:$0xff]
    %v101 = vld [vmem:[%s2 + $0x28] sm:$0xff]
    %v102 = vld [vmem:[%s2 + $0x30] sm:$0xff]
    %v103 = vld [vmem:[%s2 + $0x38] sm:$0xff]
    %112 = vrot.lane.b32.xlu0 %v96, 32
    %v113 = vpop.permute.xlu0 %112
    %114 = vrot.lane.b32.xlu0 %v97, 32
    %v115 = vpop.permute.xlu0 %114
    %116 = vrot.lane.b32.xlu0 %v98, 32
    %v117 = vpop.permute.xlu0 %116
    %118 = vrot.lane.b32.xlu0 %v99, 32
    %v119 = vpop.permute.xlu0 %118
    %120 = vrot.lane.b32.xlu0 %v100, 32
    %v121 = vpop.permute.xlu0 %120
    %122 = vrot.lane.b32.xlu0 %v101, 32
    %v123 = vpop.permute.xlu0 %122
    %124 = vrot.lane.b32.xlu0 %v102, 32
    %v125 = vpop.permute.xlu0 %124
    %126 = vrot.lane.b32.xlu0 %v103, 32
    %v127 = vpop.permute.xlu0 %126
    %v136 = vmul.f32 %v92, %v113
    %v137 = vmul.f32 %v94, %v115
    %v138 = vmul.f32 %v92, %v117
    %v139 = vmul.f32 %v94, %v119
    %v140 = vmul.f32 %v92, %v121
    %v141 = vmul.f32 %v94, %v123
    %v142 = vmul.f32 %v92, %v125
    %v143 = vmul.f32 %v94, %v127
    %v144 = vpack.c.bf16 %v137, %v136
    %v145 = vpack.c.bf16 %v139, %v138
    %v146 = vpack.c.bf16 %v141, %v140
    %v147 = vpack.c.bf16 %v143, %v142
    %148 = vrot.lane.b32.xlu0 %v96, 64
    %v149 = vpop.permute.xlu0 %148
    %150 = vrot.lane.b32.xlu0 %v97, 64
    %v151 = vpop.permute.xlu0 %150
    %152 = vrot.lane.b32.xlu0 %v98, 64
    %v153 = vpop.permute.xlu0 %152
    %154 = vrot.lane.b32.xlu0 %v99, 64
    %v155 = vpop.permute.xlu0 %154
    %156 = vrot.lane.b32.xlu0 %v100, 64
    %v157 = vpop.permute.xlu0 %156
    %158 = vrot.lane.b32.xlu0 %v101, 64
    %v159 = vpop.permute.xlu0 %158
    %160 = vrot.lane.b32.xlu0 %v102, 64
    %v161 = vpop.permute.xlu0 %160
    %162 = vrot.lane.b32.xlu0 %v103, 64
    %v163 = vpop.permute.xlu0 %162
    %v172 = vmul.f32 %v92, %v149
    %v173 = vmul.f32 %v94, %v151
    %v174 = vmul.f32 %v92, %v153
    %v175 = vmul.f32 %v94, %v155
    %v176 = vmul.f32 %v92, %v157
    %v177 = vmul.f32 %v94, %v159
    %v178 = vmul.f32 %v92, %v161
    %v179 = vmul.f32 %v94, %v163
    %v180 = vpack.c.bf16 %v173, %v172
    %v181 = vpack.c.bf16 %v175, %v174
    %v182 = vpack.c.bf16 %v177, %v176
    %v183 = vpack.c.bf16 %v179, %v178
    %v184 = vpack.c.bf16 %v94, %v92
    %v185 = vld [vmem:[%s1] sm:$0xff]
    %v186 = vld [vmem:[%s1 + $0x8] sm:$0xff]
    %191 = vrot.lane.b32.xlu0 %v144, 96
    %v192 = vpop.permute.xlu0 %191
    %193 = vrot.lane.b32.xlu0 %v145, 96
    %v194 = vpop.permute.xlu0 %193
    %195 = vrot.lane.b32.xlu0 %v146, 96
    %v196 = vpop.permute.xlu0 %195
    %197 = vrot.lane.b32.xlu0 %v147, 96
    %v198 = vpop.permute.xlu0 %197
    %v200 = vsel %vm78, %v184, 0
    %v203 = vsel %vm78, %v192, 0
    %v206 = vsel %vm78, %v194, 0
    %v209 = vsel %vm78, %v196, 0
    %v212 = vsel %vm78, %v198, 0
    %214 = vmatpush.bf16.xpose.msra.mxu0 0
    %215 = vmatpush.bf16.xpose.msra.mxu0 0
    %216 = vmatpush.bf16.xpose.msra.mxu0 0
    %217 = vmatpush.bf16.xpose.msra.mxu0 0
    %218 = vmatpush.bf16.xpose.msra.mxu0 %v212
    %219 = vmatpush.bf16.xpose.msra.mxu0 %v209
    %220 = vmatpush.bf16.xpose.msra.mxu0 %v206
    %221 = vmatpush.bf16.xpose.msra.mxu0 %v203
    %222 = vmatmul.bf16.gmra.mxu0 %v200
    %v223 = vpop.f32.mrf.mxu0
    %v224 = vadd.f32 %v185, %v223
    %v225 = vpop.f32.mrf.mxu0
    %v226 = vadd.f32 %v186, %v225
    %227 = vdwg.mxu0
    %vm228 = vcmask 523264
    %v229 = vsel %vm228, %v224, -inf
    %230 = vmax.xlane.f32.xlu0 %v229
    %v231 = vpop.xlane.xlu0 %230
    %v232 = vsel %vm228, %v226, -inf
    %233 = vmax.xlane.f32.xlu0 %v232
    %v234 = vpop.xlane.xlu0 %233
    %v235 = vsub.f32 %v224, %v231
    %v236 = vsub.f32 %v226, %v234
    %v237 = vmul.f32 %v235, 1.442695
    %v238 = vpow.pop %v237
    %v239 = vmul.f32 %v236, 1.442695
    %v240 = vpow.pop %v239
    %v241 = vpack.c.bf16 %v240, %v238
    %v242 = vld [vmem:[%s3] sm:$0xf]
    %v243 = vld [vmem:[%s3 + $0x4] sm:$0xf]
    %v244 = vld [vmem:[%s3 + $0x8] sm:$0xf]
    %v245 = vld [vmem:[%s3 + $0xc] sm:$0xf]
    %v246 = vld [vmem:[%s3 + $0x10] sm:$0xf]
    %v247 = vld [vmem:[%s3 + $0x14] sm:$0xf]
    %v248 = vld [vmem:[%s3 + $0x18] sm:$0xf]
    %v249 = vld [vmem:[%s3 + $0x1c] sm:$0xf]
    %v258 = vunpack.c.l.b16 %v242
    %v259 = vunpack.c.l.b16 %v243
    %v260 = vunpack.c.l.b16 %v244
    %v261 = vunpack.c.l.b16 %v245
    %v262 = vunpack.c.l.b16 %v246
    %v263 = vunpack.c.l.b16 %v247
    %v264 = vunpack.c.l.b16 %v248
    %v265 = vunpack.c.l.b16 %v249
    %v266 = vpack.c.b16 %v259, %v258
    %v267 = vpack.c.b16 %v261, %v260
    %v268 = vpack.c.b16 %v263, %v262
    %v269 = vpack.c.b16 %v265, %v264
    %v275 = vsel %vm228, %v241, 0
    %277 = vmatpush.bf16.msra.mxu0 0
    %278 = vmatpush.bf16.msra.mxu0 0
    %279 = vmatpush.bf16.msra.mxu0 0
    %280 = vmatpush.bf16.msra.mxu0 0
    %281 = vmatpush.bf16.msra.mxu0 %v269
    %282 = vmatpush.bf16.msra.mxu0 %v268
    %283 = vmatpush.bf16.msra.mxu0 %v267
    %284 = vmatpush.bf16.msra.mxu0 %v266
    %285 = vmatmul.bf16.gmra.mxu0 %v275
    %v286 = vpop.f32.mrf.mxu0
    %v287 = vadd.f32 0.0, %v286
    %v288 = vpop.f32.mrf.mxu0
    %v289 = vadd.f32 0.0, %v288
    %290 = vdwg.mxu0
    %v291 = vrcp.pop %v287
    %v292 = vmul.f32 %v287, %v291
    %v293 = vsub.f32 1.0, %v292
    %v294 = vmul.f32 %v291, %v293
    %v295 = vadd.f32 %v291, %v294
    %vm296 = vweird.f32 %v287
    %vm297 = vweird.f32 %v291
    %vm298 = vmor %vm296, %vm297
    %v299 = vsel %vm298, %v291, %v295
    %v300 = vand.u32 2147483647, %v287
    %vm301 = vcmp.eq.f32.partialorder %v300, 8.507059e+37
    %v302 = vand.u32 %v287, 2147483648
    %v303 = vor.u32 1.1754944e-38, %v302
    %v304 = vsel %vm301, %v303, %v299
    %v305 = vmul.f32 %v238, %v304
    %v306 = vrcp.pop %v289
    %v307 = vmul.f32 %v289, %v306
    %v308 = vsub.f32 1.0, %v307
    %v309 = vmul.f32 %v306, %v308
    %v310 = vadd.f32 %v306, %v309
    %vm311 = vweird.f32 %v289
    %vm312 = vweird.f32 %v306
    %vm313 = vmor %vm311, %vm312
    %v314 = vsel %vm313, %v306, %v310
    %v315 = vand.u32 2147483647, %v289
    %vm316 = vcmp.eq.f32.partialorder %v315, 8.507059e+37
    %v317 = vand.u32 %v289, 2147483648
    %v318 = vor.u32 1.1754944e-38, %v317
    %v319 = vsel %vm316, %v318, %v314
    %v320 = vmul.f32 %v240, %v319
    %v321 = vpack.c.bf16 %v320, %v305
    %326 = vrot.lane.b32.xlu0 %v180, 64
    %v327 = vpop.permute.xlu0 %326
    %328 = vrot.lane.b32.xlu0 %v181, 64
    %v329 = vpop.permute.xlu0 %328
    %330 = vrot.lane.b32.xlu0 %v182, 64
    %v331 = vpop.permute.xlu0 %330
    %332 = vrot.lane.b32.xlu0 %v183, 64
    %v333 = vpop.permute.xlu0 %332
    %v339 = vsel %vm228, %v321, 0
    %341 = vmatpush.bf16.msra.mxu0 0
    %342 = vmatpush.bf16.msra.mxu0 0
    %343 = vmatpush.bf16.msra.mxu0 0
    %344 = vmatpush.bf16.msra.mxu0 0
    %345 = vmatpush.bf16.msra.mxu0 %v333
    %346 = vmatpush.bf16.msra.mxu0 %v331
    %347 = vmatpush.bf16.msra.mxu0 %v329
    %348 = vmatpush.bf16.msra.mxu0 %v327
    %349 = vmatmul.bf16.gmra.mxu0 %v339
    %v350 = vpop.f32.mrf.mxu0
    %v351 = vadd.f32 0.0, %v350
    %v352 = vpop.f32.mrf.mxu0
    %v353 = vadd.f32 0.0, %v352
    %354 = vdwg.mxu0
    %v355 = vpack.c.bf16 %v353, %v351
    %v356 = vld [vmem:[%s6] sm:$0xf]
    %v357 = vld [vmem:[%s6 + $0x4] sm:$0xf]
    %v358 = vld [vmem:[%s6 + $0x8] sm:$0xf]
    %v359 = vld [vmem:[%s6 + $0xc] sm:$0xf]
    %v360 = vld [vmem:[%s7] sm:$0x1]
    %v362 = vperm.slane %v360, 0
    %v368 = vunpack.c.l.b16 %v356
    %v369 = vunpack.c.l.b16 %v357
    %v370 = vunpack.c.l.b16 %v358
    %v371 = vunpack.c.l.b16 %v359
    %v372 = vpack.c.b16 %v369, %v368
    %v373 = vpack.c.b16 %v371, %v370
    %v377 = vsel %vm78, %v355, 0
    %379 = vmatpush.bf16.msra.mxu0 0
    %380 = vmatpush.bf16.msra.mxu0 0
    %381 = vmatpush.bf16.msra.mxu0 0
    %382 = vmatpush.bf16.msra.mxu0 0
    %383 = vmatpush.bf16.msra.mxu0 0
    %384 = vmatpush.bf16.msra.mxu0 0
    %385 = vmatpush.bf16.msra.mxu0 %v373
    %386 = vmatpush.bf16.msra.mxu0 %v372
    %387 = vmatmul.bf16.gmra.mxu0 %v377
    %v388 = vpop.f32.mrf.mxu0
    %v389 = vadd.f32 %v362, %v388
    %v390 = vpop.f32.mrf.mxu0
    %v391 = vadd.f32 %v362, %v390
    %392 = vdwg.mxu0
    %v393 = vadd.f32 %v55, %v389
    %v394 = vadd.f32 %v56, %v391
    %v395 = vld [vmem:[%s8] sm:$0x1]
    %v396 = vld [vmem:[%s9] sm:$0x1]
    %v397 = vsel %vm78, %v393, 0.0
    %398 = vadd.xlane.f32.xlu0 %v397
    %v399 = vpop.xlane.xlu0 %398
    %v400 = vsel %vm78, %v394, 0.0
    %401 = vadd.xlane.f32.xlu0 %v400
    %v402 = vpop.xlane.xlu0 %401
    %v403 = vrcp.pop 32.0
    %v404 = vmul.f32 32.0, %v403
    %v405 = vsub.f32 1.0, %v404
    %v406 = vmul.f32 %v403, %v405
    %v407 = vadd.f32 %v403, %v406
    %vm408 = vweird.f32 %v403
    %v409 = vsel %vm408, %v403, %v407
    %v410 = vmul.f32 %v399, %v409
    %v411 = vmul.f32 %v402, %v409
    %v412 = vsub.f32 %v393, %v410
    %v413 = vsub.f32 %v394, %v411
    %v414 = vmul.f32 %v412, %v412
    %v415 = vmul.f32 %v413, %v413
    %v416 = vsel %vm78, %v414, 0.0
    %417 = vadd.xlane.f32.xlu0 %v416
    %v418 = vpop.xlane.xlu0 %417
    %v419 = vsel %vm78, %v415, 0.0
    %420 = vadd.xlane.f32.xlu0 %v419
    %v421 = vpop.xlane.xlu0 %420
    %v422 = vmul.f32 %v418, 0.032258064
    %v423 = vmul.f32 %v421, 0.032258064
    %v425 = vperm.slane %v395, 0
    %v427 = vmul.f32 %v425, %v412
    %v428 = vmul.f32 %v425, %v413
    %v429 = vrsqrt.pop %v422
    %v430 = vmul.f32 %v429, %v422
    %v431 = vmul.f32 %v430, %v429
    %v432 = vmul.f32 0.5, %v431
    %v433 = vsub.f32 1.5, %v432
    %v434 = vmul.f32 %v429, %v433
    %v435 = vmul.f32 %v422, %v434
    %vm436 = vcmp.eq.f32.partialorder %v422, inf
    %v437 = vsel %vm436, %v422, %v435
    %vm438 = vcmp.eq.f32.partialorder %v422, 0.0
    %v439 = vand.u32 %v422, 2147483648
    %v440 = vsel %vm438, %v439, %v437
    %v441 = vrsqrt.pop %v423
    %v442 = vmul.f32 %v441, %v423
    %v443 = vmul.f32 %v442, %v441
    %v444 = vmul.f32 0.5, %v443
    %v445 = vsub.f32 1.5, %v444
    %v446 = vmul.f32 %v441, %v445
    %v447 = vmul.f32 %v423, %v446
    %vm448 = vcmp.eq.f32.partialorder %v423, inf
    %v449 = vsel %vm448, %v423, %v447
    %vm450 = vcmp.eq.f32.partialorder %v423, 0.0
    %v451 = vand.u32 %v423, 2147483648
    %v452 = vsel %vm450, %v451, %v449
    %v453 = vadd.f32 %v440, 1e-06
    %v454 = vadd.f32 %v452, 1e-06
    %v455 = vrcp.pop %v453
    %v456 = vmul.f32 %v453, %v455
    %v457 = vsub.f32 1.0, %v456
    %v458 = vmul.f32 %v455, %v457
    %v459 = vadd.f32 %v455, %v458
    %vm460 = vweird.f32 %v453
    %vm461 = vweird.f32 %v455
    %vm462 = vmor %vm460, %vm461
    %v463 = vsel %vm462, %v455, %v459
    %v464 = vand.u32 2147483647, %v453
    %vm465 = vcmp.eq.f32.partialorder %v464, 8.507059e+37
    %v466 = vand.u32 %v453, 2147483648
    %v467 = vor.u32 1.1754944e-38, %v466
    %v468 = vsel %vm465, %v467, %v463
    %v469 = vmul.f32 %v427, %v468
    %v470 = vrcp.pop %v454
    %v471 = vmul.f32 %v454, %v470
    %v472 = vsub.f32 1.0, %v471
    %v473 = vmul.f32 %v470, %v472
    %v474 = vadd.f32 %v470, %v473
    %vm475 = vweird.f32 %v454
    %vm476 = vweird.f32 %v470
    %vm477 = vmor %vm475, %vm476
    %v478 = vsel %vm477, %v470, %v474
    %v479 = vand.u32 2147483647, %v454
    %vm480 = vcmp.eq.f32.partialorder %v479, 8.507059e+37
    %v481 = vand.u32 %v454, 2147483648
    %v482 = vor.u32 1.1754944e-38, %v481
    %v483 = vsel %vm480, %v482, %v478
    %v484 = vmul.f32 %v428, %v483
    %v486 = vperm.slane %v396, 0
    %v488 = vadd.f32 %v469, %v486
    %v489 = vadd.f32 %v484, %v486
    %v490 = vpack.c.bf16 %v489, %v488
    %v491 = vld [vmem:[%s10] sm:$0xf]
    %v492 = vld [vmem:[%s10 + $0x4] sm:$0xf]
    %v493 = vld [vmem:[%s10 + $0x8] sm:$0xf]
    %v494 = vld [vmem:[%s10 + $0xc] sm:$0xf]
    %v495 = vld [vmem:[%s11] sm:$0x1]
    %v497 = vperm.slane %v495, 0
    %v503 = vunpack.c.l.b16 %v491
    %v504 = vunpack.c.l.b16 %v492
    %v505 = vunpack.c.l.b16 %v493
    %v506 = vunpack.c.l.b16 %v494
    %v507 = vpack.c.b16 %v504, %v503
    %v508 = vpack.c.b16 %v506, %v505
    %v512 = vsel %vm78, %v490, 0
    %514 = vmatpush.bf16.msra.mxu0 0
    %515 = vmatpush.bf16.msra.mxu0 0
    %516 = vmatpush.bf16.msra.mxu0 0
    %517 = vmatpush.bf16.msra.mxu0 0
    %518 = vmatpush.bf16.msra.mxu0 0
    %519 = vmatpush.bf16.msra.mxu0 0
    %520 = vmatpush.bf16.msra.mxu0 %v508
    %521 = vmatpush.bf16.msra.mxu0 %v507
    %522 = vmatmul.bf16.gmra.mxu0 %v512
    %v523 = vpop.f32.mrf.mxu0
    %v524 = vadd.f32 %v497, %v523
    %v525 = vpop.f32.mrf.mxu0
    %v526 = vadd.f32 %v497, %v525
    %527 = vdwg.mxu0
    %v528 = vmax.f32 %v524, 0.0
    %v529 = vmax.f32 %v526, 0.0
    %v530 = vpack.c.bf16 %v529, %v528
    %v531 = vld [vmem:[%s12] sm:$0xf]
    %v532 = vld [vmem:[%s12 + $0x4] sm:$0xf]
    %v533 = vld [vmem:[%s12 + $0x8] sm:$0xf]
    %v534 = vld [vmem:[%s12 + $0xc] sm:$0xf]
    %v535 = vld [vmem:[%s12 + $0x10] sm:$0xf]
    %v536 = vld [vmem:[%s12 + $0x14] sm:$0xf]
    %v537 = vld [vmem:[%s12 + $0x18] sm:$0xf]
    %v538 = vld [vmem:[%s12 + $0x1c] sm:$0xf]
    %v539 = vld [vmem:[%s13] sm:$0x1]
    %v541 = vperm.slane %v539, 0
    %v551 = vunpack.c.l.b16 %v531
    %v552 = vunpack.c.l.b16 %v532
    %v553 = vunpack.c.l.b16 %v533
    %v554 = vunpack.c.l.b16 %v534
    %v555 = vunpack.c.l.b16 %v535
    %v556 = vunpack.c.l.b16 %v536
    %v557 = vunpack.c.l.b16 %v537
    %v558 = vunpack.c.l.b16 %v538
    %v559 = vpack.c.b16 %v552, %v551
    %v560 = vpack.c.b16 %v554, %v553
    %v561 = vpack.c.b16 %v556, %v555
    %v562 = vpack.c.b16 %v558, %v557
    %v568 = vsel %vm228, %v530, 0
    %570 = vmatpush.bf16.msra.mxu0 0
    %571 = vmatpush.bf16.msra.mxu0 0
    %572 = vmatpush.bf16.msra.mxu0 0
    %573 = vmatpush.bf16.msra.mxu0 0
    %574 = vmatpush.bf16.msra.mxu0 %v562
    %575 = vmatpush.bf16.msra.mxu0 %v561
    %576 = vmatpush.bf16.msra.mxu0 %v560
    %577 = vmatpush.bf16.msra.mxu0 %v559
    %578 = vmatmul.bf16.gmra.mxu0 %v568
    %v579 = vpop.f32.mrf.mxu0
    %v580 = vadd.f32 %v541, %v579
    %v581 = vpop.f32.mrf.mxu0
    %v582 = vadd.f32 %v541, %v581
    %583 = vdwg.mxu0
    %v584 = vadd.f32 %v488, %v580
    %v585 = vadd.f32 %v489, %v582
    %v586 = vld [vmem:[%s14] sm:$0x1]
    %v587 = vld [vmem:[%s15] sm:$0x1]
    %v588 = vsel %vm78, %v584, 0.0
    %589 = vadd.xlane.f32.xlu0 %v588
    %v590 = vpop.xlane.xlu0 %589
    %v591 = vsel %vm78, %v585, 0.0
    %592 = vadd.xlane.f32.xlu0 %v591
    %v593 = vpop.xlane.xlu0 %592
    %v594 = vmul.f32 %v590, %v409
    %v595 = vmul.f32 %v593, %v409
    %v596 = vsub.f32 %v584, %v594
    %v597 = vsub.f32 %v585, %v595
    %v598 = vmul.f32 %v596, %v596
    %v599 = vmul.f32 %v597, %v597
    %v600 = vsel %vm78, %v598, 0.0
    %601 = vadd.xlane.f32.xlu0 %v600
    %v602 = vpop.xlane.xlu0 %601
    %v603 = vsel %vm78, %v599, 0.0
    %604 = vadd.xlane.f32.xlu0 %v603
    %v605 = vpop.xlane.xlu0 %604
    %v606 = vmul.f32 %v602, 0.032258064
    %v607 = vmul.f32 %v605, 0.032258064
    %v609 = vperm.slane %v586, 0
    %v611 = vmul.f32 %v609, %v596
    %v612 = vmul.f32 %v609, %v597
    %v613 = vrsqrt.pop %v606
    %v614 = vmul.f32 %v613, %v606
    %v615 = vmul.f32 %v614, %v613
    %v616 = vmul.f32 0.5, %v615
    %v617 = vsub.f32 1.5, %v616
    %v618 = vmul.f32 %v613, %v617
    %v619 = vmul.f32 %v606, %v618
    %vm620 = vcmp.eq.f32.partialorder %v606, inf
    %v621 = vsel %vm620, %v606, %v619
    %vm622 = vcmp.eq.f32.partialorder %v606, 0.0
    %v623 = vand.u32 %v606, 2147483648
    %v624 = vsel %vm622, %v623, %v621
    %v625 = vrsqrt.pop %v607
    %v626 = vmul.f32 %v625, %v607
    %v627 = vmul.f32 %v626, %v625
    %v628 = vmul.f32 0.5, %v627
    %v629 = vsub.f32 1.5, %v628
    %v630 = vmul.f32 %v625, %v629
    %v631 = vmul.f32 %v607, %v630
    %vm632 = vcmp.eq.f32.partialorder %v607, inf
    %v633 = vsel %vm632, %v607, %v631
    %vm634 = vcmp.eq.f32.partialorder %v607, 0.0
    %v635 = vand.u32 %v607, 2147483648
    %v636 = vsel %vm634, %v635, %v633
    %v637 = vadd.f32 %v624, 1e-06
    %v638 = vadd.f32 %v636, 1e-06
    %v639 = vrcp.pop %v637
    %v640 = vmul.f32 %v637, %v639
    %v641 = vsub.f32 1.0, %v640
    %v642 = vmul.f32 %v639, %v641
    %v643 = vadd.f32 %v639, %v642
    %vm644 = vweird.f32 %v637
    %vm645 = vweird.f32 %v639
    %vm646 = vmor %vm644, %vm645
    %v647 = vsel %vm646, %v639, %v643
    %v648 = vand.u32 2147483647, %v637
    %vm649 = vcmp.eq.f32.partialorder %v648, 8.507059e+37
    %v650 = vand.u32 %v637, 2147483648
    %v651 = vor.u32 1.1754944e-38, %v650
    %v652 = vsel %vm649, %v651, %v647
    %v653 = vmul.f32 %v611, %v652
    %v654 = vrcp.pop %v638
    %v655 = vmul.f32 %v638, %v654
    %v656 = vsub.f32 1.0, %v655
    %v657 = vmul.f32 %v654, %v656
    %v658 = vadd.f32 %v654, %v657
    %vm659 = vweird.f32 %v638
    %vm660 = vweird.f32 %v654
    %vm661 = vmor %vm659, %vm660
    %v662 = vsel %vm661, %v654, %v658
    %v663 = vand.u32 2147483647, %v638
    %vm664 = vcmp.eq.f32.partialorder %v663, 8.507059e+37
    %v665 = vand.u32 %v638, 2147483648
    %v666 = vor.u32 1.1754944e-38, %v665
    %v667 = vsel %vm664, %v666, %v662
    %v668 = vmul.f32 %v612, %v667
    %v670 = vperm.slane %v587, 0
    %v672 = vadd.f32 %v653, %v670
    %v673 = vadd.f32 %v668, %v670
    %674 = vst.msk [vmem:[#allocation2] sm:$0xff] %vm78, %v672
    %675 = vst.msk [vmem:[#allocation2 + $0x8] sm:$0xff] %vm78, %v673
    // Predicated region
    $region66: #{sa_forward.1} parent=1 // pred_check
      _
    $region67: #{sa_forward.1} parent=1 // pred_check_branch
      %677 = sbr.rel (0) target = $region69
    $region68: #{sa_forward.1} parent=1 // pred_region
      %679 = vsyncadd [#allocation3], 0
      %s680 = sshll.u32 [#allocation2], 4
      %s681 = int_to_ptr.vmem [resolvable:$true] %s680
      %s682 = sshll.u32 %s16, 4
      %s683 = int_to_ptr.hbm [resolvable:$true] %s682
      %688 = dma.vmem_to_hbm [thread:$0]  %s681, 256, %s683, [#allocation3], 128, 128, 8
    $region69: #{sa_forward.1} parent=1 // pred_fallthru
      _
    // Predicated region
    $region70: #{sa_forward.1} parent=1 // pred_check
      _
    $region71: #{sa_forward.1} parent=1 // pred_check_branch
      %690 = sbr.rel (0) target = $region73
    $region72: #{sa_forward.1} parent=1 // pred_region
      %692 = dma.done [#allocation3], 256
    $region73: #{sa_forward.1} parent=1 // pred_fallthru
      _
    %693 = vsyncpa [#allocation3], 1

</llo_original>
